<compile_context>
chip_gen: v7x
topology: tpu7x:2x2x1
jax: 0.10.0
libtpu: 0.0.40
codegen_flags: <defaults>
</compile_context>

<pallas_src>
import math

import jax
import jax.numpy as jnp
from jax import lax
from jax.experimental import pallas as pl
from jax.experimental.pallas import tpu as pltpu

_MIB = 1024 * 1024


def _tpu_vmem_capacity_bytes() -> int:
    try:
        return int(pltpu.get_tpu_info().vmem_capacity_bytes)
    except Exception:
        return 64 * _MIB  # conservative (v7x-sized) fallback


def _make_fused_kernel(inv_n: float):
    """Single-block fast path: global sum + broadcast subtract in one kernel."""
    def kernel(x_ref, o_ref):
        xf = x_ref[...].astype(jnp.float32)
        # Sublane reduce first, then lane reduce.
        total = jnp.sum(jnp.sum(xf, axis=0, keepdims=True), axis=1, keepdims=True)
        o_ref[...] = (xf - total * inv_n).astype(o_ref.dtype)
    return kernel


def _make_partial_sum_kernel(rows_total: int, row_tile: int, tiles_per_core: int):
    """Pass 1: per-core partial sums, ragged / duplicate tiles masked in-kernel."""
    def kernel(x_ref, acc_ref):
        c = pl.program_id(0)           # "parallel" axis (2 TCs on v7x)
        i = pl.program_id(1)           # "arbitrary" reduction axis

        @pl.when(i == 0)
        def _():
            acc_ref[...] = jnp.zeros_like(acc_ref)

        tile_idx = c * tiles_per_core + i          # un-clamped logical tile index
        valid_rows = rows_total - tile_idx * row_tile
        xf = x_ref[...].astype(jnp.float32)
        row_ids = lax.broadcasted_iota(jnp.int32, (xf.shape[0], 1), 0)
        xf = jnp.where(row_ids < valid_rows, xf, 0.0)   # mask ragged/duplicate tiles
        part = jnp.sum(jnp.sum(xf, axis=0, keepdims=True), axis=1, keepdims=True)
        # Every element of the (8,128) accumulator block holds the running total.
        acc_ref[...] += part
    return kernel


def _make_subtract_kernel(inv_n: float):
    """Pass 2: combine the two per-core partials and broadcast-subtract the mean."""
    def kernel(partials_ref, x_ref, o_ref):
        # partials_ref is the (16,128) SMEM array; block rows 0..7 = core 0,
        # rows 8..15 = core 1, each filled with that core's running total.
        total = partials_ref[0, 0] + partials_ref[8, 0]
        mu = total * inv_n                               # 1/n folded in-kernel
        o_ref[...] = (x_ref[...].astype(jnp.float32) - mu).astype(o_ref.dtype)
    return kernel


def centered_layer(x: jax.Array, *, force_tiled: bool = False,
                   row_tile: int | None = None) -> jax.Array:
    """Equivalent of PyTorch CenteredLayer.forward: X - X.mean() (global mean)."""
    orig_shape = x.shape
    n = int(x.size)
    if n == 0:
        return x
    inv_n = 1.0 / n                     # folded at trace time; true element count
    itemsize = jnp.dtype(x.dtype).itemsize

    # Copy-less 2-D view: collapse leading dims, keep the last dim intact.
    if x.ndim >= 2:
        R = int(math.prod(orig_shape[:-1]))
        C = int(orig_shape[-1])
    elif x.ndim == 1 and n >= 1024 and n % 1024 == 0:
        R, C = n // 1024, 1024          # lane-dense free reshape for 1-D inputs
    else:
        R, C = 1, n                     # 0-D / small or awkward 1-D
    x2 = x.reshape(R, C)

    vmem_cap = _tpu_vmem_capacity_bytes()
    big_vmem = vmem_cap >= 100 * _MIB             # v5e / v6e (128 MiB); v7x is 64 MiB
    fast_budget = (80 if big_vmem else 40) * _MIB
    fast_vmem_limit = (104 if big_vmem else 52) * _MIB
    tiled_vmem_limit = (64 if big_vmem else 48) * _MIB

    # --- whole-in-VMEM fused fast path: 2N HBM traffic, no padding / slicing ---
    # VMEM working set ~ n * (in + out + f32 temps) = n * (2*itemsize + 8).
    if (not force_tiled) and n * (2 * itemsize + 8) <= fast_budget:
        out = pl.pallas_call(
            _make_fused_kernel(inv_n),
            out_shape=jax.ShapeDtypeStruct((R, C), x.dtype),
            grid=(),
            in_specs=[pl.BlockSpec((R, C), lambda: (0, 0))],
            out_specs=pl.BlockSpec((R, C), lambda: (0, 0)),
            compiler_params=pltpu.CompilerParams(
                vmem_limit_bytes=fast_vmem_limit),
        )(x2)
        return out.reshape(orig_shape)

    # --- tiled two-pass path (3N traffic): no wrapper-side pad/slice; the
    #     ragged last row-tile is masked in pass 1 and OOB output stores are
    #     dropped by Pallas in pass 2. ---
    if row_tile is None:
        tile_target_elems = 2 * 1024 * 1024        # ~8 MiB of f32 per tile
        row_tile = max(8, (tile_target_elems // max(C, 1)) // 8 * 8)
    if row_tile >= R:
        row_tile = R                               # single tile: full dim, exempt
    else:
        row_tile = max(8, (int(row_tile) // 8) * 8)
    # TODO(synk): if a single 8-row tile of the collapsed last dim (> ~1M f32
    # elements) no longer fits VMEM, a column-tiled variant would be needed.

    num_tiles = (R + row_tile - 1) // row_tile
    tiles_per_core = (num_tiles + 1) // 2          # 2-way split for v7x's two TCs

    def in_map_p1(c, i):
        # Clamp so no block DMA ever starts out of bounds (the in-kernel mask
        # based on the un-clamped index zeroes the duplicate/ragged rows).
        return (jnp.minimum(c * tiles_per_core + i, num_tiles - 1), 0)

    # Pass 1: per-core partial sums accumulated in resident (8,128) f32 blocks.
    partials = pl.pallas_call(
        _make_partial_sum_kernel(R, row_tile, tiles_per_core),
        out_shape=jax.ShapeDtypeStruct((16, 128), jnp.float32),
        grid=(2, tiles_per_core),
        in_specs=[pl.BlockSpec((row_tile, C), in_map_p1)],
        out_specs=pl.BlockSpec((8, 128), lambda c, i: (c, 0)),
        compiler_params=pltpu.CompilerParams(
            dimension_semantics=("parallel", "arbitrary"),
            vmem_limit_bytes=tiled_vmem_limit),
    )(x2)

    # Pass 2: broadcast subtract; partials combined + scaled inside the kernel.
    out = pl.pallas_call(
        _make_subtract_kernel(inv_n),
        out_shape=jax.ShapeDtypeStruct((R, C), x.dtype),
        grid=(num_tiles,),
        in_specs=[pl.BlockSpec(memory_space=pltpu.MemorySpace.SMEM),
                  pl.BlockSpec((row_tile, C), lambda i: (i, 0))],
        out_specs=pl.BlockSpec((row_tile, C), lambda i: (i, 0)),
        compiler_params=pltpu.CompilerParams(
            dimension_semantics=("parallel",),
            vmem_limit_bytes=tiled_vmem_limit),
    )(partials, x2)
    return out.reshape(orig_shape)


if __name__ == "__main__":
    key = jax.random.PRNGKey(0)
    k1, k2 = jax.random.split(key)

    # Spec's example input: X = torch.ones(2, 3) -> output must be all zeros.
    x_ones = jnp.ones((2, 3), dtype=jnp.float32)
    y_ones = centered_layer(x_ones)
    jax.block_until_ready(y_ones)
    assert y_ones.shape == x_ones.shape and y_ones.dtype == x_ones.dtype
    assert jnp.allclose(y_ones, jnp.zeros_like(x_ones), atol=1e-6), "ones mismatch"

    # Small random tensor (fused single-block fast path).
    x_small = jax.random.normal(k1, (8, 32), dtype=jnp.float32)
    y_small = centered_layer(x_small)
    jax.block_until_ready(y_small)
    ref_small = x_small - jnp.mean(x_small)
    assert y_small.shape == x_small.shape and y_small.dtype == x_small.dtype
    assert jnp.allclose(y_small, ref_small, atol=1e-5, rtol=1e-5), "fast-path mismatch"
    assert abs(float(jnp.mean(y_small))) < 1e-5

    # Tiled two-pass path: odd number of row tiles (5), ragged last tile, last
    # dim not a multiple of 128 — exercises in-kernel masking, the clamped
    # duplicate tile on core 1, and the two-core partial-sum combine.
    x_big = jax.random.normal(k2, (264, 130), dtype=jnp.float32)
    y_big = centered_layer(x_big, force_tiled=True, row_tile=64)
    jax.block_until_ready(y_big)
    ref_big = x_big - jnp.mean(x_big)
    assert y_big.shape == x_big.shape and y_big.dtype == x_big.dtype
    assert jnp.allclose(y_big, ref_big, atol=1e-5, rtol=1e-5), "tiled-path mismatch"
    assert abs(float(jnp.mean(y_big))) < 1e-4

    print("KERNEL_OK")
</pallas_src>

<mosaic_0001>
module attributes {stable_mosaic.version = 11 : i64} {
  func.func @kernel(%arg0: memref<2x3xf32, #tpu.memory_space<vmem>>, %arg1: memref<2x3xf32, #tpu.memory_space<vmem>>) attributes {dimension_semantics = [], scalar_prefetch = 0 : i64, scratch_operands = 0 : i64, tpu.core_type = #tpu.core_type<tc>} {
    %c0 = arith.constant 0 : index
    %c0_0 = arith.constant 0 : index
    %0 = vector.load %arg0[%c0, %c0_0] : memref<2x3xf32, #tpu.memory_space<vmem>>, vector<2x3xf32>
    %cst = arith.constant dense<0.000000e+00> : vector<3xf32>
    %1 = vector.multi_reduction <add>, %0, %cst [0] : vector<2x3xf32> to vector<3xf32>
    %2 = vector.shape_cast %1 : vector<3xf32> to vector<1x3xf32>
    %cst_1 = arith.constant dense<0.000000e+00> : vector<1xf32>
    %3 = vector.multi_reduction <add>, %2, %cst_1 [1] : vector<1x3xf32> to vector<1xf32>
    %4 = vector.shape_cast %3 : vector<1xf32> to vector<1x1xf32>
    %cst_2 = arith.constant 0.166666672 : f32
    %5 = vector.broadcast %cst_2 : f32 to vector<1x1xf32>
    %6 = arith.mulf %4, %5 : vector<1x1xf32>
    %7 = vector.broadcast %6 : vector<1x1xf32> to vector<2x3xf32>
    %8 = arith.subf %0, %7 : vector<2x3xf32>
    %c0_3 = arith.constant 0 : index
    %c0_4 = arith.constant 0 : index
    %9 = vector.load %arg1[%c0_3, %c0_4] : memref<2x3xf32, #tpu.memory_space<vmem>>, vector<2x3xf32>
    tpu.vector_store %arg1[%c0_3, %c0_4], %8 {strides = array<i32>} : memref<2x3xf32, #tpu.memory_space<vmem>>, vector<2x3xf32>,
    return
  }
}

</mosaic_0001>

<llo_original>
// kernel: tpu_custom_call.1
$region0: #{tpu_custom_call.1}
  #allocation0 [shape = 'u32[]', space=smem, size = 0x4, offset = 0x4, fixed_abs, tag = 'smem constant byte address 0x4 - core index']
  #allocation1 [shape = 'u32[144,128]{1,0:T(1,128)}', space=vmem, size = 0x12000, scoped, tag = 'internal scratch']
  %s0 = inlined_call_operand.hbm [shape: f32[2,3], index: 0, kind: input, shape index: {}]
  %s1 = inlined_call_operand.hbm [shape: f32[2,3], index: 1, kind: output, shape index: {}]
  %s2 = sld [smem:[#allocation0]]
  $region18: #{tpu_custom_call.1} parent=0
    _
  %s4 = ssub.s32 1, %s2
  %s5 = scalar_select 0, %s4, %s2
  $region1: #{tpu_custom_call.1} parent=0
    #allocation2 [shape = 'u8[1024]{0}', space=vmem, size = 0x400, scoped, tag = 'input window, operand 0, single buffered']
    #allocation3 [shape = 's32[1]{0}', space=sflag, size = 0x4, scoped, tag = 'scoped memory for tpu_custom_call.1']
    #allocation4 [shape = 's32[1]{0}', space=sflag, size = 0x4, scoped, tag = 'scoped memory for tpu_custom_call.1']
    #allocation5 [shape = 'u8[1024]{0}', space=vmem, size = 0x400, scoped, tag = 'output window, operand 0, single buffered']
    %6 = vsyncpa [#allocation3], 0
    %7 = vsyncpa [#allocation4], 0
    // Predicated region
    $region2: #{tpu_custom_call.1} parent=1 // pred_check
      _
    $region3: #{tpu_custom_call.1} parent=1 // pred_check_branch
      %9 = sbr.rel (0) target = $region5
    $region4: #{tpu_custom_call.1} parent=1 // pred_region
      %s11 = ssub.s32 32, 32
      %12 = vsyncadd [#allocation3], %s11
      %s14 = sshll.u32 [#allocation2], 4
      %s15 = int_to_ptr.vmem [resolvable:$true] %s14
      %17 = dma.hbm_to_vmem [thread:$0]  %s0, 32, %s15, [#allocation3]
    $region5: #{tpu_custom_call.1} parent=1 // pred_fallthru
      _
    // Predicated region
    $region6: #{tpu_custom_call.1} parent=1 // pred_check
      _
    $region7: #{tpu_custom_call.1} parent=1 // pred_check_branch
      %19 = sbr.rel (0) target = $region9
    $region8: #{tpu_custom_call.1} parent=1 // pred_region
      %20 = dma.done [#allocation3], 32
    $region9: #{tpu_custom_call.1} parent=1 // pred_fallthru
      _
    %v21 = vld [vmem:[#allocation2] sm:$0x3]
    %vm22 = vcmask 17408
    %v23 = vsel %vm22, %v21, 0.0
    %v24 = vrot.slane %v23, 4
    %v25 = vadd.f32 %v23, %v24
    %v26 = vrot.slane %v25, 2
    %v27 = vadd.f32 %v25, %v26
    %v28 = vrot.slane %v27, 1
    %v29 = vadd.f32 %v27, %v28
    %vm30 = vcmask 23552
    %v31 = vsel %vm30, %v29, 0.0
    %32 = vadd.xlane.f32.xlu0 %v31
    %v33 = vpop.xlane.xlu0 %32
    %v34 = vmul.f32 %v33, 0.16666667
    %v35 = vsub.f32 %v21, %v34
    %36 = vst.msk [vmem:[#allocation5] sm:$0x3] %vm22, %v35
    // Predicated region
    $region10: #{tpu_custom_call.1} parent=1 // pred_check
      _
    $region11: #{tpu_custom_call.1} parent=1 // pred_check_branch
      %38 = sbr.rel (0) target = $region13
    $region12: #{tpu_custom_call.1} parent=1 // pred_region
      %s40 = ssub.s32 32, 32
      %41 = vsyncadd [#allocation4], %s40
      %s43 = sshll.u32 [#allocation5], 4
      %s44 = int_to_ptr.vmem [resolvable:$true] %s43
      %46 = dma.vmem_to_hbm [thread:$0]  %s44, 32, %s1, [#allocation4]
    $region13: #{tpu_custom_call.1} parent=1 // pred_fallthru
      _
    // Predicated region
    $region14: #{tpu_custom_call.1} parent=1 // pred_check
      _
    $region15: #{tpu_custom_call.1} parent=1 // pred_check_branch
      %48 = sbr.rel (0) target = $region17
    $region16: #{tpu_custom_call.1} parent=1 // pred_region
      %49 = dma.done [#allocation4], 32
    $region17: #{tpu_custom_call.1} parent=1 // pred_fallthru
      _
    %50 = vsyncpa [#allocation3], 1
    %51 = vsyncpa [#allocation4], 1

</llo_original>
